<compile_context>
chip_gen: v5e
topology: v5e:2x2
jax: 0.10.0
libtpu: 0.0.40
codegen_flags: <defaults>
</compile_context>

<pallas_src>
import math

import jax
import jax.numpy as jnp
from jax import lax
from jax.experimental import pallas as pl
from jax.experimental.pallas import tpu as pltpu


def _round_up(x, m):
    return ((x + m - 1) // m) * m


def _pick_col_tile(h, cap):
    """Largest tile <= cap that divides h, preferring multiples of 128."""
    if h <= cap:
        return h
    best = None
    t = 128
    while t <= cap:
        if h % t == 0:
            best = t
        t += 128
    if best is not None:
        return best
    for t in range(cap, 0, -1):
        if h % t == 0:
            return t
    return h


def _resblock_kernel(x_mm_ref, w_ref, b_ref, x_res_ref, o_ref, acc_ref):
    # x_mm_ref : (tm, tk)  bf16 input tile (matmul operand)
    # w_ref    : (tn, tk)  bf16 weight tile, PyTorch (out, in) layout
    # b_ref    : (1, tn)   f32 bias tile
    # x_res_ref: (tm, tn)  original-dtype input tile (residual)
    # o_ref    : (tm, tn)  output tile
    # acc_ref  : (tm, tn)  f32 accumulator scratch
    @pl.when(pl.program_id(2) == 0)
    def _():
        acc_ref[...] = jnp.zeros_like(acc_ref)

    # x @ W.T on the MXU (bf16 inputs, f32 accumulation); no transpose copy.
    acc_ref[...] += lax.dot_general(
        x_mm_ref[...],
        w_ref[...],
        dimension_numbers=(((1,), (1,)), ((), ())),
        preferred_element_type=jnp.float32,
    )

    @pl.when(pl.program_id(2) == pl.num_programs(2) - 1)
    def _():
        h = acc_ref[...] + b_ref[...]          # f32 epilogue
        silu = h * jax.nn.sigmoid(h)           # SiLU (EUP sigmoid, VPU mul)
        o_ref[...] = (x_res_ref[...].astype(jnp.float32) + silu).astype(o_ref.dtype)


def resblock_forward(x, weight, bias, *, row_tile=256, col_tile=512):
    """y = x + SiLU(x @ weight.T + bias).

    x      : (..., H) array.
    weight : (H, H) in PyTorch nn.Linear layout (out_features, in_features).
    bias   : (H,).
    """
    orig_shape = x.shape
    H = orig_shape[-1]
    out_dtype = x.dtype
    x2d = x.reshape(-1, H)
    M = x2d.shape[0]

    # Row tile: big (default 256) for MXU efficiency; pad ragged row counts.
    tm = min(row_tile, _round_up(M, 8))
    tm = _round_up(tm, 8)
    M_pad = _round_up(M, tm)
    if M_pad != M:
        x2d = jnp.pad(x2d, ((0, M_pad - M), (0, 0)))

    # Column (N) / reduction (K) tiles bound VMEM for large hidden sizes.
    tn = _pick_col_tile(H, col_tile)
    tk = _pick_col_tile(H, col_tile)

    # Feed the MXU bf16 (f32 residual kept separately for the epilogue).
    x_mm = x2d.astype(jnp.bfloat16)
    w_bf = weight if weight.dtype == jnp.bfloat16 else weight.astype(jnp.bfloat16)
    b2d = bias.astype(jnp.float32).reshape(1, H)

    grid = (M_pad // tm, H // tn, H // tk)

    res_bytes = jnp.dtype(x2d.dtype).itemsize
    out_bytes = jnp.dtype(out_dtype).itemsize
    block_bytes = (
        2 * (tm * tk * 2)          # x_mm, double-buffered
        + 2 * (tn * tk * 2)        # weight tile, double-buffered
        + 2 * (tn * 4)             # bias tile
        + 2 * (tm * tn * res_bytes)  # residual x tile
        + 2 * (tm * tn * out_bytes)  # output tile
        + tm * tn * 4              # accumulator scratch
    )
    vmem_limit = int(min(64 << 20, max(32 << 20, 2 * block_bytes)))

    cost = pl.CostEstimate(
        flops=2 * M_pad * H * H,
        transcendentals=M_pad * H,
        bytes_accessed=int(
            M_pad * H * 2 * (H // tn)      # bf16 x streamed per n-tile
            + H * H * 2 * (M_pad // tm)    # bf16 weight streamed per row-tile
            + M_pad * H * res_bytes        # residual x
            + M_pad * H * out_bytes        # output
        ),
    )

    out = pl.pallas_call(
        _resblock_kernel,
        out_shape=jax.ShapeDtypeStruct((M_pad, H), out_dtype),
        grid_spec=pltpu.PrefetchScalarGridSpec(
            num_scalar_prefetch=0,
            grid=grid,
            in_specs=[
                pl.BlockSpec((tm, tk), lambda i, j, k: (i, k)),   # x (matmul)
                pl.BlockSpec((tn, tk), lambda i, j, k: (j, k)),   # W (out, in)
                pl.BlockSpec((1, tn), lambda i, j, k: (0, j)),    # bias
                pl.BlockSpec((tm, tn), lambda i, j, k: (i, j)),   # x (residual)
            ],
            out_specs=pl.BlockSpec((tm, tn), lambda i, j, k: (i, j)),
            scratch_shapes=[pltpu.VMEM((tm, tn), jnp.float32)],
        ),
        compiler_params=pltpu.CompilerParams(
            dimension_semantics=("parallel", "parallel", "arbitrary"),
            vmem_limit_bytes=vmem_limit,
        ),
        cost_estimate=cost,
    )(x_mm, w_bf, b2d, x2d)

    return out[:M].reshape(orig_shape)


if __name__ == "__main__":
    # --- Test 1: module-faithful params (zero weight, PyTorch-default bias) ---
    batch, seq, hidden = 2, 8, 32
    key = jax.random.PRNGKey(0)
    kx, kb, kw, kx2, kb2 = jax.random.split(key, 5)

    x = jax.random.normal(kx, (batch, seq, hidden), dtype=jnp.float32)
    weight = jnp.zeros((hidden, hidden), dtype=jnp.float32)      # nn.init.zeros_
    bound = 1.0 / math.sqrt(hidden)
    bias = jax.random.uniform(kb, (hidden,), minval=-bound, maxval=bound,
                              dtype=jnp.float32)

    y = jax.block_until_ready(resblock_forward(x, weight, bias))
    h_ref = x @ weight.T + bias
    y_ref = x + h_ref * jax.nn.sigmoid(h_ref)
    assert jnp.allclose(y, y_ref, atol=1e-5, rtol=1e-5), "mismatch (zero weight)"

    # --- Test 2: non-zero weight, H multiple of 128, ragged rows, multi-K/N tiles ---
    H2 = 256
    x2 = jax.random.normal(kx2, (3, 5, H2), dtype=jnp.float32)
    w2 = jax.random.normal(kw, (H2, H2), dtype=jnp.float32) / math.sqrt(H2)
    b2 = jax.random.uniform(kb2, (H2,), minval=-0.1, maxval=0.1, dtype=jnp.float32)

    y2 = jax.block_until_ready(
        resblock_forward(x2, w2, b2, row_tile=128, col_tile=128))
    h2 = jnp.dot(x2.astype(jnp.bfloat16), w2.T.astype(jnp.bfloat16),
                 preferred_element_type=jnp.float32) + b2
    y2_ref = x2 + h2 * jax.nn.sigmoid(h2)
    assert jnp.allclose(y2, y2_ref, atol=1e-3, rtol=1e-3), "mismatch (bf16 matmul)"

    print("KERNEL_OK")
</pallas_src>

<mosaic_0001>
module attributes {stable_mosaic.version = 11 : i64} {
  func.func @_resblock_kernel(%arg0: i32, %arg1: i32, %arg2: i32, %arg3: memref<16x32xbf16, #tpu.memory_space<vmem>>, %arg4: memref<32x32xbf16, #tpu.memory_space<vmem>>, %arg5: memref<1x32xf32, #tpu.memory_space<vmem>>, %arg6: memref<16x32xf32, #tpu.memory_space<vmem>>, %arg7: memref<16x32xf32, #tpu.memory_space<vmem>>, %arg8: memref<16x32xf32, #tpu.memory_space<vmem>>) attributes {dimension_semantics = [#tpu.dimension_semantics<parallel>, #tpu.dimension_semantics<parallel>, #tpu.dimension_semantics<arbitrary>], iteration_bounds = array<i64: 1, 1, 1>, scalar_prefetch = 0 : i64, scratch_operands = 1 : i64, tpu.core_type = #tpu.core_type<tc>, window_params = [{transform_indices = @transform_0, window_bounds = array<i64: 16, 32>}, {transform_indices = @transform_1, window_bounds = array<i64: 32, 32>}, {transform_indices = @transform_2, window_bounds = array<i64: 1, 32>}, {transform_indices = @transform_3, window_bounds = array<i64: 16, 32>}, {transform_indices = @transform_4, window_bounds = array<i64: 16, 32>}]} {
    %c0_i32 = arith.constant 0 : i32
    %0 = arith.cmpi eq, %arg2, %c0_i32 : i32
    %1 = arith.extui %0 : i1 to i32
    %c0_i32_0 = arith.constant 0 : i32
    %2 = arith.cmpi ne, %1, %c0_i32_0 : i32
    scf.if %2 {
      %cst_10 = arith.constant 0.000000e+00 : f32
      %12 = vector.broadcast %cst_10 : f32 to vector<16x32xf32>
      %c0_11 = arith.constant 0 : index
      %c0_12 = arith.constant 0 : index
      %13 = vector.load %arg8[%c0_11, %c0_12] : memref<16x32xf32, #tpu.memory_space<vmem>>, vector<16x32xf32>
      tpu.vector_store %arg8[%c0_11, %c0_12], %12 {strides = array<i32>} : memref<16x32xf32, #tpu.memory_space<vmem>>, vector<16x32xf32>,
    } else {
    }
    %c0 = arith.constant 0 : index
    %c0_1 = arith.constant 0 : index
    %3 = vector.load %arg8[%c0, %c0_1] : memref<16x32xf32, #tpu.memory_space<vmem>>, vector<16x32xf32>
    %c0_2 = arith.constant 0 : index
    %c0_3 = arith.constant 0 : index
    %4 = vector.load %arg3[%c0_2, %c0_3] : memref<16x32xbf16, #tpu.memory_space<vmem>>, vector<16x32xbf16>
    %c0_4 = arith.constant 0 : index
    %c0_5 = arith.constant 0 : index
    %5 = vector.load %arg4[%c0_4, %c0_5] : memref<32x32xbf16, #tpu.memory_space<vmem>>, vector<32x32xbf16>
    %cst = arith.constant dense<0.000000e+00> : vector<16x32xf32>
    %6 = tpu.matmul %4, %5, %cst {dimension_numbers = #tpu.dot_dimension_numbers<[1], [1], [0], [0], [0, 0, 1, 0], [], []>} : vector<16x32xbf16>, vector<32x32xbf16>, vector<16x32xf32> -> vector<16x32xf32>
    %7 = arith.addf %3, %6 : vector<16x32xf32>
    %c0_6 = arith.constant 0 : index
    %c0_7 = arith.constant 0 : index
    %8 = vector.load %arg8[%c0_6, %c0_7] : memref<16x32xf32, #tpu.memory_space<vmem>>, vector<16x32xf32>
    tpu.vector_store %arg8[%c0_6, %c0_7], %7 {strides = array<i32>} : memref<16x32xf32, #tpu.memory_space<vmem>>, vector<16x32xf32>,
    %c0_i32_8 = arith.constant 0 : i32
    %9 = arith.cmpi eq, %arg2, %c0_i32_8 : i32
    %10 = arith.extui %9 : i1 to i32
    %c0_i32_9 = arith.constant 0 : i32
    %11 = arith.cmpi ne, %10, %c0_i32_9 : i32
    scf.if %11 {
      %c0_10 = arith.constant 0 : index
      %c0_11 = arith.constant 0 : index
      %12 = vector.load %arg8[%c0_10, %c0_11] : memref<16x32xf32, #tpu.memory_space<vmem>>, vector<16x32xf32>
      %c0_12 = arith.constant 0 : index
      %c0_13 = arith.constant 0 : index
      %13 = vector.load %arg5[%c0_12, %c0_13] : memref<1x32xf32, #tpu.memory_space<vmem>>, vector<1x32xf32>
      %14 = vector.broadcast %13 : vector<1x32xf32> to vector<16x32xf32>
      %15 = arith.addf %12, %14 : vector<16x32xf32>
      %16 = arith.negf %15 : vector<16x32xf32>
      %17 = math.exp %16 : vector<16x32xf32>
      %cst_14 = arith.constant 1.000000e+00 : f32
      %18 = vector.broadcast %cst_14 : f32 to vector<16x32xf32>
      %19 = arith.addf %18, %17 : vector<16x32xf32>
      %20 = arith.divf %18, %19 : vector<16x32xf32>
      %21 = arith.mulf %15, %20 : vector<16x32xf32>
      %c0_15 = arith.constant 0 : index
      %c0_16 = arith.constant 0 : index
      %22 = vector.load %arg6[%c0_15, %c0_16] : memref<16x32xf32, #tpu.memory_space<vmem>>, vector<16x32xf32>
      %23 = arith.addf %22, %21 : vector<16x32xf32>
      %c0_17 = arith.constant 0 : index
      %c0_18 = arith.constant 0 : index
      %24 = vector.load %arg7[%c0_17, %c0_18] : memref<16x32xf32, #tpu.memory_space<vmem>>, vector<16x32xf32>
      tpu.vector_store %arg7[%c0_17, %c0_18], %23 {strides = array<i32>} : memref<16x32xf32, #tpu.memory_space<vmem>>, vector<16x32xf32>,
    } else {
    }
    return
  }
  func.func @transform_0(%arg0: i32, %arg1: i32, %arg2: i32) -> (i32, i32) {
    %c0_i32 = arith.constant 0 : i32
    return %arg0, %arg2 : i32, i32
  }
  func.func @transform_1(%arg0: i32, %arg1: i32, %arg2: i32) -> (i32, i32) {
    %c0_i32 = arith.constant 0 : i32
    return %arg1, %arg2 : i32, i32
  }
  func.func @transform_2(%arg0: i32, %arg1: i32, %arg2: i32) -> (i32, i32) {
    %c0_i32 = arith.constant 0 : i32
    %c0_i32_0 = arith.constant 0 : i32
    return %c0_i32, %arg1 : i32, i32
  }
  func.func @transform_3(%arg0: i32, %arg1: i32, %arg2: i32) -> (i32, i32) {
    %c0_i32 = arith.constant 0 : i32
    return %arg0, %arg1 : i32, i32
  }
  func.func @transform_4(%arg0: i32, %arg1: i32, %arg2: i32) -> (i32, i32) {
    %c0_i32 = arith.constant 0 : i32
    return %arg0, %arg1 : i32, i32
  }
}

</mosaic_0001>

<llo_original>
// kernel: tpu_custom_call.1
$region0: #{tpu_custom_call.1}
  #allocation0 [shape = 'u32[]', space=smem, size = 0x4, offset = 0x4, fixed_abs, tag = 'smem constant byte address 0x4 - core index']
  #allocation1 [shape = 'u32[72,128]{1,0:T(1,128)}', space=vmem, size = 0x9000, scoped, tag = 'internal scratch']
  #allocation2 [shape = 'f32[16,32]{1,0:T(8,128)}', space=vmem, size = 0x2000, scoped, tag = 'scratch operand']
  %s0 = inlined_call_operand.hbm [shape: bf16[16,32], index: 0, kind: input, shape index: {}]
  %s1 = inlined_call_operand.hbm [shape: bf16[32,32], index: 1, kind: input, shape index: {}]
  %s2 = inlined_call_operand.vmem [shape: f32[1,32], index: 2, kind: input, shape index: {}]
  %s3 = inlined_call_operand.hbm [shape: f32[16,32], index: 3, kind: input, shape index: {}]
  %s4 = inlined_call_operand.hbm [shape: f32[16,32], index: 4, kind: output, shape index: {}]
  %s5 = sld [smem:[#allocation0]]
  $region46: #{tpu_custom_call.1} parent=0
    _
  %s7 = ssub.s32 1, %s5
  %s8 = scalar_select 0, %s7, %s5
  $region1: #{tpu_custom_call.1} parent=0
    #allocation3 [shape = 'u8[4096]{0}', space=vmem, size = 0x1000, scoped, tag = 'input window, operand 0, single buffered']
    #allocation4 [shape = 's32[1]{0}', space=sflag, size = 0x4, scoped, tag = 'scoped memory for tpu_custom_call.1']
    #allocation5 [shape = 's32[1]{0}', space=sflag, size = 0x4, scoped, tag = 'scoped memory for tpu_custom_call.1']
    #allocation6 [shape = 'u8[8192]{0}', space=vmem, size = 0x2000, scoped, tag = 'input window, operand 1, single buffered']
    #allocation7 [shape = 's32[1]{0}', space=sflag, size = 0x4, scoped, tag = 'scoped memory for tpu_custom_call.1']
    #allocation8 [shape = 'u8[8192]{0}', space=vmem, size = 0x2000, scoped, tag = 'input window, operand 3, single buffered']
    #allocation9 [shape = 'u8[8192]{0}', space=vmem, size = 0x2000, scoped, tag = 'output window, operand 0, single buffered']
    %9 = vsyncpa [#allocation4], 0
    %10 = vsyncpa [#allocation7], 0
    %11 = vsyncpa [#allocation5], 0
    // Predicated region
    $region2: #{tpu_custom_call.1} parent=1 // pred_check
      _
    $region3: #{tpu_custom_call.1} parent=1 // pred_check_branch
      %13 = sbr.rel (0) target = $region5
    $region4: #{tpu_custom_call.1} parent=1 // pred_region
      %15 = vsyncadd [#allocation4], 0
      %s16 = sshll.u32 %s0, 4
      %s17 = int_to_ptr.hbm [resolvable:$true] %s16
      %s18 = sshll.u32 [#allocation3], 4
      %s19 = int_to_ptr.vmem [resolvable:$true] %s18
      %24 = dma.hbm_to_vmem [thread:$0]  %s17, 128, %s19, [#allocation4], 64, 64, 4
    $region5: #{tpu_custom_call.1} parent=1 // pred_fallthru
      _
    // Predicated region
    $region6: #{tpu_custom_call.1} parent=1 // pred_check
      _
    $region7: #{tpu_custom_call.1} parent=1 // pred_check_branch
      %26 = sbr.rel (0) target = $region9
    $region8: #{tpu_custom_call.1} parent=1 // pred_region
      %28 = vsyncadd [#allocation7], 0
      %s29 = sshll.u32 %s1, 4
      %s30 = int_to_ptr.hbm [resolvable:$true] %s29
      %s31 = sshll.u32 [#allocation6], 4
      %s32 = int_to_ptr.vmem [resolvable:$true] %s31
      %37 = dma.hbm_to_vmem [thread:$0]  %s30, 256, %s32, [#allocation7], 64, 64, 4
    $region9: #{tpu_custom_call.1} parent=1 // pred_fallthru
      _
    // Predicated region
    $region10: #{tpu_custom_call.1} parent=1 // pred_check
      _
    $region11: #{tpu_custom_call.1} parent=1 // pred_check_branch
      %39 = sbr.rel (0) target = $region13
    $region12: #{tpu_custom_call.1} parent=1 // pred_region
      _
    $region13: #{tpu_custom_call.1} parent=1 // pred_fallthru
      _
    // Predicated region
    $region14: #{tpu_custom_call.1} parent=1 // pred_check
      _
    $region15: #{tpu_custom_call.1} parent=1 // pred_check_branch
      %41 = sbr.rel (0) target = $region17
    $region16: #{tpu_custom_call.1} parent=1 // pred_region
      %43 = vsyncadd [#allocation7], 0
      %s44 = sshll.u32 %s3, 4
      %s45 = int_to_ptr.hbm [resolvable:$true] %s44
      %s46 = sshll.u32 [#allocation8], 4
      %s47 = int_to_ptr.vmem [resolvable:$true] %s46
      %52 = dma.hbm_to_vmem [thread:$0]  %s45, 256, %s47, [#allocation7], 128, 128, 8
    $region17: #{tpu_custom_call.1} parent=1 // pred_fallthru
      _
    // Predicated region
    $region18: #{tpu_custom_call.1} parent=1 // pred_check
      _
    $region19: #{tpu_custom_call.1} parent=1 // pred_check_branch
      %54 = sbr.rel (0) target = $region21
    $region20: #{tpu_custom_call.1} parent=1 // pred_region
      %56 = dma.done [#allocation4], 128
    $region21: #{tpu_custom_call.1} parent=1 // pred_fallthru
      _
    // Predicated region
    $region22: #{tpu_custom_call.1} parent=1 // pred_check
      _
    $region23: #{tpu_custom_call.1} parent=1 // pred_check_branch
      %58 = sbr.rel (0) target = $region25
    $region24: #{tpu_custom_call.1} parent=1 // pred_region
      %60 = dma.done [#allocation7], 256
    $region25: #{tpu_custom_call.1} parent=1 // pred_fallthru
      _
    // Predicated region
    $region26: #{tpu_custom_call.1} parent=1 // pred_check
      _
    $region27: #{tpu_custom_call.1} parent=1 // pred_check_branch
      %62 = sbr.rel (0) target = $region29
    $region28: #{tpu_custom_call.1} parent=1 // pred_region
      %64 = dma.done [#allocation7], 256
    $region29: #{tpu_custom_call.1} parent=1 // pred_fallthru
      _
    %p66 = scmp.eq.s32.totalorder 0, 0
    // Predicated region
    $region30: #{tpu_custom_call.1} parent=1 // pred_check
      %p67 = pneg %p66
    $region31: #{tpu_custom_call.1} parent=1 // pred_check_branch
      %69 = sbr.rel (%p67) target = $region33
    $region32: #{tpu_custom_call.1} parent=1 // pred_region
      %vm70 = vcmask 261120
      %71 = vst.msk [vmem:[#allocation2] sm:$0xff] %vm70, 0.0
      %72 = vst.msk [vmem:[#allocation2 + $0x8] sm:$0xff] %vm70, 0.0
    $region33: #{tpu_custom_call.1} parent=1 // pred_fallthru
      _
    %v73 = vld [vmem:[#allocation2] sm:$0xff]
    %v74 = vld [vmem:[#allocation2 + $0x8] sm:$0xff]
    %v75 = vld [vmem:[#allocation3] sm:$0xf]
    %v76 = vld [vmem:[#allocation3 + $0x4] sm:$0xf]
    %v77 = vld [vmem:[#allocation6] sm:$0xf]
    %v78 = vld [vmem:[#allocation6 + $0x4] sm:$0xf]
    %v79 = vld [vmem:[#allocation6 + $0x8] sm:$0xf]
    %v80 = vld [vmem:[#allocation6 + $0xc] sm:$0xf]
    %v83 = vunpack.c.l.b16 %v75
    %v84 = vunpack.c.l.b16 %v76
    %v85 = vpack.c.b16 %v84, %v83
    %v90 = vunpack.c.l.b16 %v77
    %v91 = vunpack.c.l.b16 %v78
    %v92 = vunpack.c.l.b16 %v79
    %v93 = vunpack.c.l.b16 %v80
    %v94 = vpack.c.b16 %v91, %v90
    %v95 = vpack.c.b16 %v93, %v92
    %vm96 = vcmask 261120
    %v98 = vsel %vm96, %v85, 0
    %v101 = vsel %vm96, %v94, 0
    %v104 = vsel %vm96, %v95, 0
    %106 = vmatpush.bf16.xpose.msra.mxu0 0
    %107 = vmatpush.bf16.xpose.msra.mxu0 0
    %108 = vmatpush.bf16.xpose.msra.mxu0 0
    %109 = vmatpush.bf16.xpose.msra.mxu0 0
    %110 = vmatpush.bf16.xpose.msra.mxu0 0
    %111 = vmatpush.bf16.xpose.msra.mxu0 0
    %112 = vmatpush.bf16.xpose.msra.mxu0 %v104
    %113 = vmatpush.bf16.xpose.msra.mxu0 %v101
    %114 = vmatmul.bf16.gmra.mxu0 %v98
    %v115 = vpop.f32.mrf.mxu0
    %v116 = vadd.f32 0.0, %v115
    %v117 = vpop.f32.mrf.mxu0
    %v118 = vadd.f32 0.0, %v117
    %119 = vdwg.mxu0
    %v120 = vadd.f32 %v73, %v116
    %v121 = vadd.f32 %v74, %v118
    %122 = vst.msk [vmem:[#allocation2] sm:$0xff] %vm96, %v120
    %123 = vst.msk [vmem:[#allocation2 + $0x8] sm:$0xff] %vm96, %v121
    // Predicated region
    $region34: #{tpu_custom_call.1} parent=1 // pred_check
      %p124 = pneg %p66
    $region35: #{tpu_custom_call.1} parent=1 // pred_check_branch
      %126 = sbr.rel (%p124) target = $region37
    $region36: #{tpu_custom_call.1} parent=1 // pred_region
      %v127 = vld [vmem:[#allocation2] sm:$0xff]
      %v128 = vld [vmem:[#allocation2 + $0x8] sm:$0xff]
      %v129 = vld [vmem:[%s2] sm:$0x1]
      %v131 = vperm.slane %v129, 0
      %v133 = vadd.f32 %v127, %v131
      %v134 = vadd.f32 %v128, %v131
      %v135 = vxor.u32 %v133, 2147483648
      %v136 = vxor.u32 %v134, 2147483648
      %v137 = vmul.f32 %v135, 1.442695
      %v138 = vpow.pop %v137
      %v139 = vmul.f32 %v136, 1.442695
      %v140 = vpow.pop %v139
      %v141 = vadd.f32 %v138, 1.0
      %v142 = vadd.f32 %v140, 1.0
      %v143 = vrcp.pop %v141
      %v144 = vmul.f32 %v141, %v143
      %v145 = vsub.f32 1.0, %v144
      %v146 = vmul.f32 %v143, %v145
      %v147 = vadd.f32 %v143, %v146
      %vm148 = vweird.f32 %v141
      %vm149 = vweird.f32 %v143
      %vm150 = vmor %vm148, %vm149
      %v151 = vsel %vm150, %v143, %v147
      %v152 = vand.u32 2147483647, %v141
      %vm153 = vcmp.eq.f32.partialorder %v152, 8.507059e+37
      %v154 = vand.u32 %v141, 2147483648
      %v155 = vor.u32 1.1754944e-38, %v154
      %v156 = vsel %vm153, %v155, %v151
      %v157 = vmul.f32 1.0, %v156
      %v158 = vrcp.pop %v142
      %v159 = vmul.f32 %v142, %v158
      %v160 = vsub.f32 1.0, %v159
      %v161 = vmul.f32 %v158, %v160
      %v162 = vadd.f32 %v158, %v161
      %vm163 = vweird.f32 %v142
      %vm164 = vweird.f32 %v158
      %vm165 = vmor %vm163, %vm164
      %v166 = vsel %vm165, %v158, %v162
      %v167 = vand.u32 2147483647, %v142
      %vm168 = vcmp.eq.f32.partialorder %v167, 8.507059e+37
      %v169 = vand.u32 %v142, 2147483648
      %v170 = vor.u32 1.1754944e-38, %v169
      %v171 = vsel %vm168, %v170, %v166
      %v172 = vmul.f32 1.0, %v171
      %v173 = vmul.f32 %v133, %v157
      %v174 = vmul.f32 %v134, %v172
      %v175 = vld [vmem:[#allocation8] sm:$0xff]
      %v176 = vld [vmem:[#allocation8 + $0x8] sm:$0xff]
      %v177 = vadd.f32 %v175, %v173
      %v178 = vadd.f32 %v176, %v174
      %179 = vst.msk [vmem:[#allocation9] sm:$0xff] %vm96, %v177
      %180 = vst.msk [vmem:[#allocation9 + $0x8] sm:$0xff] %vm96, %v178
    $region37: #{tpu_custom_call.1} parent=1 // pred_fallthru
      _
    // Predicated region
    $region38: #{tpu_custom_call.1} parent=1 // pred_check
      _
    $region39: #{tpu_custom_call.1} parent=1 // pred_check_branch
      %182 = sbr.rel (0) target = $region41
    $region40: #{tpu_custom_call.1} parent=1 // pred_region
      %184 = vsyncadd [#allocation5], 0
      %s185 = sshll.u32 [#allocation9], 4
      %s186 = int_to_ptr.vmem [resolvable:$true] %s185
      %s187 = sshll.u32 %s4, 4
      %s188 = int_to_ptr.hbm [resolvable:$true] %s187
      %193 = dma.vmem_to_hbm [thread:$0]  %s186, 256, %s188, [#allocation5], 128, 128, 8
    $region41: #{tpu_custom_call.1} parent=1 // pred_fallthru
      _
    // Predicated region
    $region42: #{tpu_custom_call.1} parent=1 // pred_check
      _
    $region43: #{tpu_custom_call.1} parent=1 // pred_check_branch
      %195 = sbr.rel (0) target = $region45
    $region44: #{tpu_custom_call.1} parent=1 // pred_region
      %197 = dma.done [#allocation5], 256
    $region45: #{tpu_custom_call.1} parent=1 // pred_fallthru
      _
    %198 = vsyncpa [#allocation4], 1
    %199 = vsyncpa [#allocation7], 1
    %200 = vsyncpa [#allocation5], 1

</llo_original>
